<compile_context>
chip_gen: v7x
topology: tpu7x:2x2x1
jax: 0.10.0
libtpu: 0.0.40
codegen_flags: <defaults>
</compile_context>

<pallas_src>
import functools

import jax
import jax.numpy as jnp
from jax.experimental import pallas as pl
from jax.experimental.pallas import tpu as pltpu

LANES = 128


def _round_up(n, m):
    return (n + m - 1) // m * m


def _pack_params(tensors):
    """Pack 2-D f32 arrays into one (rows, 128)-lane zero-padded buffer.

    Every tensor starts at an 8-aligned (sublane-aligned) row offset so the
    kernel can read each layer's weights/bias via static, tile-aligned slices
    of a single VMEM-resident ref.  Returns (packed_buffer, row_offsets).
    """
    offsets = []
    row = 0
    for t in tensors:
        offsets.append(row)
        row += _round_up(t.shape[0], 8)
    buf = jnp.zeros((_round_up(row, 8), LANES), jnp.float32)
    for off, t in zip(offsets, tensors):
        buf = buf.at[off:off + t.shape[0], : t.shape[1]].set(t.astype(jnp.float32))
    return buf, tuple(offsets)


def _make_mlp_kernel(shapes, offsets):
    """Build the fused 3-layer MLP kernel (static packing layout baked in)."""
    (w1s, b1s, w2s, b2s, w3s, b3s) = shapes
    (ow1, ob1, ow2, ob2, ow3, ob3) = offsets

    def kernel(x_ref, p_ref, o_ref):
        x = x_ref[...]

        w1 = p_ref[ow1:ow1 + w1s[0], 0:w1s[1]]
        b1 = p_ref[ob1:ob1 + 1, 0:b1s[1]]
        h1 = jnp.dot(x, w1, preferred_element_type=jnp.float32) + b1
        h1 = jnp.maximum(h1, 0.0)

        w2 = p_ref[ow2:ow2 + w2s[0], 0:w2s[1]]
        b2 = p_ref[ob2:ob2 + 1, 0:b2s[1]]
        h2 = jnp.dot(h1, w2, preferred_element_type=jnp.float32) + b2
        h2 = jnp.maximum(h2, 0.0)

        w3 = p_ref[ow3:ow3 + w3s[0], 0:w3s[1]]
        b3 = p_ref[ob3:ob3 + 1, 0:b3s[1]]
        y = jnp.dot(h2, w3, preferred_element_type=jnp.float32) + b3

        o_ref[...] = y.astype(o_ref.dtype)

    return kernel


@functools.partial(jax.jit, static_argnames=("block_rows",))
def mlp_forward(x, w1, b1, w2, b2, w3, b3, *, block_rows=512):
    B, in_f = x.shape
    out_f = w3.shape[1]

    params, offsets = _pack_params([w1, b1, w2, b2, w3, b3])
    shapes = tuple(t.shape for t in (w1, b1, w2, b2, w3, b3))
    kernel = _make_mlp_kernel(shapes, offsets)

    # Tile the batch dimension: Pallas double-buffers the x / out tiles and
    # overlaps the HBM streaming of x with the matmuls.  The packed parameter
    # buffer has a constant index_map, so it is fetched once and stays
    # VMEM-resident across grid steps.
    tb = block_rows if B > block_rows else _round_up(B, 8)
    b_pad = _round_up(B, tb)
    if b_pad != B:
        x = jnp.pad(x, ((0, b_pad - B), (0, 0)))

    out = pl.pallas_call(
        kernel,
        out_shape=jax.ShapeDtypeStruct((b_pad, out_f), jnp.float32),
        grid=(b_pad // tb,),
        in_specs=[
            pl.BlockSpec((tb, in_f), lambda i: (i, 0)),
            pl.BlockSpec(params.shape, lambda i: (0, 0)),  # weights resident
        ],
        out_specs=pl.BlockSpec((tb, out_f), lambda i: (i, 0)),
        compiler_params=pltpu.CompilerParams(
            dimension_semantics=("parallel",),
        ),
    )(x, params)
    return out[:B]


def init_linear_params(key, in_f, out_f):
    # Deterministic init mimicking PyTorch's nn.Linear default:
    # U(-1/sqrt(in_f), 1/sqrt(in_f)) for both weight and bias.
    kw, kb = jax.random.split(key)
    bound = 1.0 / (in_f ** 0.5)
    # stored as (in_f, out_f) == PyTorch weight.T
    w = jax.random.uniform(kw, (in_f, out_f), jnp.float32, -bound, bound)
    b = jax.random.uniform(kb, (1, out_f), jnp.float32, -bound, bound)
    return w, b


def _reference(x, w1, b1, w2, b2, w3, b3):
    h = jnp.maximum(x @ w1 + b1, 0.0)
    h = jnp.maximum(h @ w2 + b2, 0.0)
    return h @ w3 + b3


if __name__ == "__main__":
    in_features, h1, h2, out_features = 30, 24, 12, 3
    batch = 8

    key = jax.random.PRNGKey(0)
    k_x, k1, k2, k3, k_big = jax.random.split(key, 5)

    x = jax.random.normal(k_x, (batch, in_features), jnp.float32)
    w1, b1 = init_linear_params(k1, in_features, h1)
    w2, b2 = init_linear_params(k2, h1, h2)
    w3, b3 = init_linear_params(k3, h2, out_features)

    # Small-batch run (single grid step).
    y = mlp_forward(x, w1, b1, w2, b2, w3, b3)
    jax.block_until_ready(y)
    ref = _reference(x, w1, b1, w2, b2, w3, b3)
    assert y.shape == (batch, out_features)
    assert jnp.allclose(y, ref, atol=1e-5, rtol=1e-5)

    # Multi-tile run exercising the batch grid + ragged-batch padding path.
    x_big = jax.random.normal(k_big, (700, in_features), jnp.float32)
    y_big = mlp_forward(x_big, w1, b1, w2, b2, w3, b3, block_rows=512)
    jax.block_until_ready(y_big)
    ref_big = _reference(x_big, w1, b1, w2, b2, w3, b3)
    assert y_big.shape == (700, out_features)
    assert jnp.allclose(y_big, ref_big, atol=1e-5, rtol=1e-5)

    print("KERNEL_OK")
</pallas_src>

<mosaic_0001>
module attributes {stable_mosaic.version = 11 : i64} {
  func.func @kernel(%arg0: i32, %arg1: memref<8x30xf32, #tpu.memory_space<vmem>>, %arg2: memref<96x128xf32, #tpu.memory_space<vmem>>, %arg3: memref<8x3xf32, #tpu.memory_space<vmem>>) attributes {dimension_semantics = [#tpu.dimension_semantics<parallel>], iteration_bounds = array<i64: 1>, scalar_prefetch = 0 : i64, scratch_operands = 0 : i64, tpu.core_type = #tpu.core_type<tc>, window_params = [{transform_indices = @transform_0, window_bounds = array<i64: 8, 30>}, {pipeline_mode = #tpu.pipeline_mode<synchronous>, transform_indices = @transform_1, window_bounds = array<i64: 96, 128>}, {transform_indices = @transform_2, window_bounds = array<i64: 8, 3>}]} {
    %c0 = arith.constant 0 : index
    %c0_0 = arith.constant 0 : index
    %0 = vector.load %arg1[%c0, %c0_0] : memref<8x30xf32, #tpu.memory_space<vmem>>, vector<8x30xf32>
    %c0_1 = arith.constant 0 : index
    %c0_2 = arith.constant 0 : index
    %1 = vector.load %arg2[%c0_1, %c0_2] : memref<96x128xf32, #tpu.memory_space<vmem>>, vector<30x24xf32>
    %c32 = arith.constant 32 : index
    %c0_3 = arith.constant 0 : index
    %2 = vector.load %arg2[%c32, %c0_3] : memref<96x128xf32, #tpu.memory_space<vmem>>, vector<1x24xf32>
    %cst = arith.constant dense<0.000000e+00> : vector<8x24xf32>
    %3 = tpu.matmul %0, %1, %cst {dimension_numbers = #tpu.dot_dimension_numbers<[1], [0], [0], [1], [0, 0, 1, 1], [], []>} : vector<8x30xf32>, vector<30x24xf32>, vector<8x24xf32> -> vector<8x24xf32>
    %4 = vector.broadcast %2 : vector<1x24xf32> to vector<8x24xf32>
    %5 = arith.addf %3, %4 : vector<8x24xf32>
    %cst_4 = arith.constant 0.000000e+00 : f32
    %6 = vector.broadcast %cst_4 : f32 to vector<8x24xf32>
    %7 = arith.maximumf %5, %6 : vector<8x24xf32>
    %c40 = arith.constant 40 : index
    %c0_5 = arith.constant 0 : index
    %8 = vector.load %arg2[%c40, %c0_5] : memref<96x128xf32, #tpu.memory_space<vmem>>, vector<24x12xf32>
    %c64 = arith.constant 64 : index
    %c0_6 = arith.constant 0 : index
    %9 = vector.load %arg2[%c64, %c0_6] : memref<96x128xf32, #tpu.memory_space<vmem>>, vector<1x12xf32>
    %cst_7 = arith.constant dense<0.000000e+00> : vector<8x12xf32>
    %10 = tpu.matmul %7, %8, %cst_7 {dimension_numbers = #tpu.dot_dimension_numbers<[1], [0], [0], [1], [0, 0, 1, 1], [], []>} : vector<8x24xf32>, vector<24x12xf32>, vector<8x12xf32> -> vector<8x12xf32>
    %11 = vector.broadcast %9 : vector<1x12xf32> to vector<8x12xf32>
    %12 = arith.addf %10, %11 : vector<8x12xf32>
    %cst_8 = arith.constant 0.000000e+00 : f32
    %13 = vector.broadcast %cst_8 : f32 to vector<8x12xf32>
    %14 = arith.maximumf %12, %13 : vector<8x12xf32>
    %c72 = arith.constant 72 : index
    %c0_9 = arith.constant 0 : index
    %15 = vector.load %arg2[%c72, %c0_9] : memref<96x128xf32, #tpu.memory_space<vmem>>, vector<12x3xf32>
    %c88 = arith.constant 88 : index
    %c0_10 = arith.constant 0 : index
    %16 = vector.load %arg2[%c88, %c0_10] : memref<96x128xf32, #tpu.memory_space<vmem>>, vector<1x3xf32>
    %cst_11 = arith.constant dense<0.000000e+00> : vector<8x3xf32>
    %17 = tpu.matmul %14, %15, %cst_11 {dimension_numbers = #tpu.dot_dimension_numbers<[1], [0], [0], [1], [0, 0, 1, 1], [], []>} : vector<8x12xf32>, vector<12x3xf32>, vector<8x3xf32> -> vector<8x3xf32>
    %18 = vector.broadcast %16 : vector<1x3xf32> to vector<8x3xf32>
    %19 = arith.addf %17, %18 : vector<8x3xf32>
    %c0_12 = arith.constant 0 : index
    %c0_13 = arith.constant 0 : index
    %20 = vector.load %arg3[%c0_12, %c0_13] : memref<8x3xf32, #tpu.memory_space<vmem>>, vector<8x3xf32>
    tpu.vector_store %arg3[%c0_12, %c0_13], %19 {strides = array<i32>} : memref<8x3xf32, #tpu.memory_space<vmem>>, vector<8x3xf32>,
    return
  }
  func.func @transform_0(%arg0: i32) -> (i32, i32) {
    %c0_i32 = arith.constant 0 : i32
    %c0_i32_0 = arith.constant 0 : i32
    return %arg0, %c0_i32 : i32, i32
  }
  func.func @transform_1(%arg0: i32) -> (i32, i32) {
    %c0_i32 = arith.constant 0 : i32
    %c0_i32_0 = arith.constant 0 : i32
    %c0_i32_1 = arith.constant 0 : i32
    return %c0_i32, %c0_i32_0 : i32, i32
  }
  func.func @transform_2(%arg0: i32) -> (i32, i32) {
    %c0_i32 = arith.constant 0 : i32
    %c0_i32_0 = arith.constant 0 : i32
    return %arg0, %c0_i32 : i32, i32
  }
}

</mosaic_0001>

<llo_original>
// kernel: mlp_forward.1
$region0: #{mlp_forward.1}
  #allocation0 [shape = 'u32[]', space=smem, size = 0x4, offset = 0x4, fixed_abs, tag = 'smem constant byte address 0x4 - core index']
  #allocation1 [shape = 'u32[144,128]{1,0:T(1,128)}', space=vmem, size = 0x12000, scoped, tag = 'internal scratch']
  %s0 = inlined_call_operand.vmem [shape: f32[8,30], index: 0, kind: input, shape index: {}]
  %s1 = inlined_call_operand.vmem [shape: f32[96,128], index: 1, kind: input, shape index: {}]
  %s2 = inlined_call_operand.vmem [shape: f32[8,3], index: 2, kind: output, shape index: {}]
  %s3 = sld [smem:[#allocation0]]
  $region18: #{mlp_forward.1} parent=0
    _
  %s5 = ssub.s32 1, %s3
  %s6 = scalar_select 0, %s5, %s3
  // Predicated region
  $region2: #{mlp_forward.1} parent=0 // pred_check
    _
  $region3: #{mlp_forward.1} parent=0 // pred_check_branch
    %8 = sbr.rel (0) target = $region5
  $region4: #{mlp_forward.1} parent=0 // pred_region
    _
  $region5: #{mlp_forward.1} parent=0 // pred_fallthru
    _
  // Predicated region
  $region6: #{mlp_forward.1} parent=0 // pred_check
    _
  $region7: #{mlp_forward.1} parent=0 // pred_check_branch
    %10 = sbr.rel (0) target = $region9
  $region8: #{mlp_forward.1} parent=0 // pred_region
    _
  $region9: #{mlp_forward.1} parent=0 // pred_fallthru
    _
  %v11 = vld [vmem:[%s0] sm:$0xff]
  %v12 = vld [vmem:[%s1] sm:$0xff]
  %v13 = vld [vmem:[%s1 + $0x8] sm:$0xff]
  %v14 = vld [vmem:[%s1 + $0x10] sm:$0xff]
  %v15 = vld [vmem:[%s1 + $0x18] sm:$0x3f]
  %v16 = vld [vmem:[%s1 + $0x20] sm:$0x1]
  %v17 = vlaneseq
  %v18 = vshrl.u32 %v17, 7
  %v19 = vsub.s32 0, %v18
  %v20 = vrot.slane %v16, %v19
  %vm21 = vcmask 244736
  %v23 = vsel %vm21, %v11, 0
  %vm25 = vcmask 1045504
  %v27 = vsel %vm25, %v15, 0
  %29 = vmatprep.subr.mxu0 0.0
  %30 = vmatpush1.msra.mxu0 %v12
  %31 = vmatprep.subr.mxu0 0.0
  %32 = vmatpush1.msra.mxu0 %v13
  %33 = vmatprep.subr.mxu0 0.0
  %34 = vmatpush1.msra.mxu0 %v14
  %35 = vmatprep.subr.mxu0 0.0
  %36 = vmatpush1.msra.mxu0 %v27
  %37 = vmatprep.subr.mxu0 0.0
  %38 = vmatpush1.msra.mxu0 0.0
  %39 = vmatprep.subr.mxu0 0.0
  %40 = vmatpush1.msra.mxu0 0.0
  %41 = vmatprep.subr.mxu0 0.0
  %42 = vmatpush1.msra.mxu0 0.0
  %43 = vmatprep.subr.mxu0 0.0
  %44 = vmatpush1.msra.mxu0 0.0
  %45 = vmatprep.subr.mxu0 0.0
  %46 = vmatpush1.msra.mxu0 0.0
  %47 = vmatprep.subr.mxu0 0.0
  %48 = vmatpush1.msra.mxu0 0.0
  %49 = vmatprep.subr.mxu0 0.0
  %50 = vmatpush1.msra.mxu0 0.0
  %51 = vmatprep.subr.mxu0 0.0
  %52 = vmatpush1.msra.mxu0 0.0
  %53 = vmatprep.subr.mxu0 0.0
  %54 = vmatpush1.msra.mxu0 0.0
  %55 = vmatprep.subr.mxu0 0.0
  %56 = vmatpush1.msra.mxu0 0.0
  %57 = vmatprep.subr.mxu0 0.0
  %58 = vmatpush1.msra.mxu0 0.0
  %59 = vmatprep.subr.mxu0 0.0
  %60 = vmatpush1.msra.mxu0 0.0
  %61 = vmatprep.subr.mxu0 0.0
  %62 = vmatpush1.msra.mxu0 0.0
  %63 = vmatprep.subr.mxu0 0.0
  %64 = vmatpush1.msra.mxu0 0.0
  %65 = vmatprep.subr.mxu0 0.0
  %66 = vmatpush1.msra.mxu0 0.0
  %67 = vmatprep.subr.mxu0 0.0
  %68 = vmatpush1.msra.mxu0 0.0
  %69 = vmatprep.subr.mxu0 0.0
  %70 = vmatpush1.msra.mxu0 0.0
  %71 = vmatprep.subr.mxu0 0.0
  %72 = vmatpush1.msra.mxu0 0.0
  %73 = vmatprep.subr.mxu0 0.0
  %74 = vmatpush1.msra.mxu0 0.0
  %75 = vmatprep.subr.mxu0 0.0
  %76 = vmatpush1.msra.mxu0 0.0
  %77 = vmatprep.subr.mxu0 0.0
  %78 = vmatpush1.msra.mxu0 0.0
  %79 = vmatprep.subr.mxu0 0.0
  %80 = vmatpush1.msra.mxu0 0.0
  %81 = vmatprep.subr.mxu0 0.0
  %82 = vmatpush1.msra.mxu0 0.0
  %83 = vmatprep.subr.mxu0 0.0
  %84 = vmatpush1.msra.mxu0 0.0
  %85 = vmatprep.subr.mxu0 0.0
  %86 = vmatpush1.msra.mxu0 0.0
  %87 = vmatprep.subr.mxu0 0.0
  %88 = vmatpush1.msra.mxu0 0.0
  %89 = vmatprep.subr.mxu0 0.0
  %90 = vmatpush1.msra.mxu0 0.0
  %91 = vmatprep.subr.mxu0 0.0
  %92 = vmatpush1.msra.mxu0 0.0
  %93 = vmatprep.mubr.f32.mxu0 0.0
  %94 = vmatmul.mubr.f32.gmra.mrb[0].mxu0 %v23
  %v95 = vpop.f32.mrb[0].mxu0
  %v96 = vadd.f32 %v20, %v95
  %v97 = vpop.f32.mrb[0].mxu0
  %98 = vdwg.mxu0
  %v99 = vmax.f32 %v96, 0.0
  %v100 = vld [vmem:[%s1 + $0x28] sm:$0xff]
  %v101 = vld [vmem:[%s1 + $0x30] sm:$0xff]
  %v102 = vld [vmem:[%s1 + $0x38] sm:$0xff]
  %v103 = vld [vmem:[%s1 + $0x40] sm:$0x1]
  %v104 = vlaneseq
  %v105 = vshrl.u32 %v104, 7
  %v106 = vsub.s32 0, %v105
  %v107 = vrot.slane %v103, %v106
  %vm108 = vcmask 195584
  %v110 = vsel %vm108, %v99, 0
  %112 = vmatprep.subr.mxu0 0.0
  %113 = vmatpush1.msra.mxu0 %v100
  %114 = vmatprep.subr.mxu0 0.0
  %115 = vmatpush1.msra.mxu0 %v101
  %116 = vmatprep.subr.mxu0 0.0
  %117 = vmatpush1.msra.mxu0 %v102
  %118 = vmatprep.subr.mxu0 0.0
  %119 = vmatpush1.msra.mxu0 0.0
  %120 = vmatprep.subr.mxu0 0.0
  %121 = vmatpush1.msra.mxu0 0.0
  %122 = vmatprep.subr.mxu0 0.0
  %123 = vmatpush1.msra.mxu0 0.0
  %124 = vmatprep.subr.mxu0 0.0
  %125 = vmatpush1.msra.mxu0 0.0
  %126 = vmatprep.subr.mxu0 0.0
  %127 = vmatpush1.msra.mxu0 0.0
  %128 = vmatprep.subr.mxu0 0.0
  %129 = vmatpush1.msra.mxu0 0.0
  %130 = vmatprep.subr.mxu0 0.0
  %131 = vmatpush1.msra.mxu0 0.0
  %132 = vmatprep.subr.mxu0 0.0
  %133 = vmatpush1.msra.mxu0 0.0
  %134 = vmatprep.subr.mxu0 0.0
  %135 = vmatpush1.msra.mxu0 0.0
  %136 = vmatprep.subr.mxu0 0.0
  %137 = vmatpush1.msra.mxu0 0.0
  %138 = vmatprep.subr.mxu0 0.0
  %139 = vmatpush1.msra.mxu0 0.0
  %140 = vmatprep.subr.mxu0 0.0
  %141 = vmatpush1.msra.mxu0 0.0
  %142 = vmatprep.subr.mxu0 0.0
  %143 = vmatpush1.msra.mxu0 0.0
  %144 = vmatprep.subr.mxu0 0.0
  %145 = vmatpush1.msra.mxu0 0.0
  %146 = vmatprep.subr.mxu0 0.0
  %147 = vmatpush1.msra.mxu0 0.0
  %148 = vmatprep.subr.mxu0 0.0
  %149 = vmatpush1.msra.mxu0 0.0
  %150 = vmatprep.subr.mxu0 0.0
  %151 = vmatpush1.msra.mxu0 0.0
  %152 = vmatprep.subr.mxu0 0.0
  %153 = vmatpush1.msra.mxu0 0.0
  %154 = vmatprep.subr.mxu0 0.0
  %155 = vmatpush1.msra.mxu0 0.0
  %156 = vmatprep.subr.mxu0 0.0
  %157 = vmatpush1.msra.mxu0 0.0
  %158 = vmatprep.subr.mxu0 0.0
  %159 = vmatpush1.msra.mxu0 0.0
  %160 = vmatprep.subr.mxu0 0.0
  %161 = vmatpush1.msra.mxu0 0.0
  %162 = vmatprep.subr.mxu0 0.0
  %163 = vmatpush1.msra.mxu0 0.0
  %164 = vmatprep.subr.mxu0 0.0
  %165 = vmatpush1.msra.mxu0 0.0
  %166 = vmatprep.subr.mxu0 0.0
  %167 = vmatpush1.msra.mxu0 0.0
  %168 = vmatprep.subr.mxu0 0.0
  %169 = vmatpush1.msra.mxu0 0.0
  %170 = vmatprep.subr.mxu0 0.0
  %171 = vmatpush1.msra.mxu0 0.0
  %172 = vmatprep.subr.mxu0 0.0
  %173 = vmatpush1.msra.mxu0 0.0
  %174 = vmatprep.subr.mxu0 0.0
  %175 = vmatpush1.msra.mxu0 0.0
  %176 = vmatprep.mubr.f32.mxu0 0.0
  %177 = vmatmul.mubr.f32.gmra.mrb[0].mxu0 %v110
  %v178 = vpop.f32.mrb[0].mxu0
  %v179 = vadd.f32 %v107, %v178
  %v180 = vpop.f32.mrb[0].mxu0
  %181 = vdwg.mxu0
  %v182 = vmax.f32 %v179, 0.0
  %v183 = vld [vmem:[%s1 + $0x48] sm:$0xff]
  %v184 = vld [vmem:[%s1 + $0x50] sm:$0xf]
  %v185 = vld [vmem:[%s1 + $0x58] sm:$0x1]
  %v186 = vlaneseq
  %v187 = vshrl.u32 %v186, 7
  %v188 = vsub.s32 0, %v187
  %v189 = vrot.slane %v185, %v188
  %vm190 = vcmask 97280
  %v192 = vsel %vm190, %v182, 0
  %vm194 = vcmask 1043456
  %v196 = vsel %vm194, %v184, 0
  %198 = vmatprep.subr.mxu0 0.0
  %199 = vmatpush1.msra.mxu0 %v183
  %200 = vmatprep.subr.mxu0 0.0
  %201 = vmatpush1.msra.mxu0 %v196
  %202 = vmatprep.subr.mxu0 0.0
  %203 = vmatpush1.msra.mxu0 0.0
  %204 = vmatprep.subr.mxu0 0.0
  %205 = vmatpush1.msra.mxu0 0.0
  %206 = vmatprep.subr.mxu0 0.0
  %207 = vmatpush1.msra.mxu0 0.0
  %208 = vmatprep.subr.mxu0 0.0
  %209 = vmatpush1.msra.mxu0 0.0
  %210 = vmatprep.subr.mxu0 0.0
  %211 = vmatpush1.msra.mxu0 0.0
  %212 = vmatprep.subr.mxu0 0.0
  %213 = vmatpush1.msra.mxu0 0.0
  %214 = vmatprep.subr.mxu0 0.0
  %215 = vmatpush1.msra.mxu0 0.0
  %216 = vmatprep.subr.mxu0 0.0
  %217 = vmatpush1.msra.mxu0 0.0
  %218 = vmatprep.subr.mxu0 0.0
  %219 = vmatpush1.msra.mxu0 0.0
  %220 = vmatprep.subr.mxu0 0.0
  %221 = vmatpush1.msra.mxu0 0.0
  %222 = vmatprep.subr.mxu0 0.0
  %223 = vmatpush1.msra.mxu0 0.0
  %224 = vmatprep.subr.mxu0 0.0
  %225 = vmatpush1.msra.mxu0 0.0
  %226 = vmatprep.subr.mxu0 0.0
  %227 = vmatpush1.msra.mxu0 0.0
  %228 = vmatprep.subr.mxu0 0.0
  %229 = vmatpush1.msra.mxu0 0.0
  %230 = vmatprep.subr.mxu0 0.0
  %231 = vmatpush1.msra.mxu0 0.0
  %232 = vmatprep.subr.mxu0 0.0
  %233 = vmatpush1.msra.mxu0 0.0
  %234 = vmatprep.subr.mxu0 0.0
  %235 = vmatpush1.msra.mxu0 0.0
  %236 = vmatprep.subr.mxu0 0.0
  %237 = vmatpush1.msra.mxu0 0.0
  %238 = vmatprep.subr.mxu0 0.0
  %239 = vmatpush1.msra.mxu0 0.0
  %240 = vmatprep.subr.mxu0 0.0
  %241 = vmatpush1.msra.mxu0 0.0
  %242 = vmatprep.subr.mxu0 0.0
  %243 = vmatpush1.msra.mxu0 0.0
  %244 = vmatprep.subr.mxu0 0.0
  %245 = vmatpush1.msra.mxu0 0.0
  %246 = vmatprep.subr.mxu0 0.0
  %247 = vmatpush1.msra.mxu0 0.0
  %248 = vmatprep.subr.mxu0 0.0
  %249 = vmatpush1.msra.mxu0 0.0
  %250 = vmatprep.subr.mxu0 0.0
  %251 = vmatpush1.msra.mxu0 0.0
  %252 = vmatprep.subr.mxu0 0.0
  %253 = vmatpush1.msra.mxu0 0.0
  %254 = vmatprep.subr.mxu0 0.0
  %255 = vmatpush1.msra.mxu0 0.0
  %256 = vmatprep.subr.mxu0 0.0
  %257 = vmatpush1.msra.mxu0 0.0
  %258 = vmatprep.subr.mxu0 0.0
  %259 = vmatpush1.msra.mxu0 0.0
  %260 = vmatprep.subr.mxu0 0.0
  %261 = vmatpush1.msra.mxu0 0.0
  %262 = vmatprep.mubr.f32.mxu0 0.0
  %263 = vmatmul.mubr.f32.gmra.mrb[0].mxu0 %v192
  %v264 = vpop.f32.mrb[0].mxu0
  %v265 = vadd.f32 %v189, %v264
  %v266 = vpop.f32.mrb[0].mxu0
  %267 = vdwg.mxu0
  %vm268 = vcmask 23552
  %269 = vst.msk [vmem:[%s2] sm:$0xff] %vm268, %v265
  // Predicated region
  $region10: #{mlp_forward.1} parent=0 // pred_check
    _
  $region11: #{mlp_forward.1} parent=0 // pred_check_branch
    %271 = sbr.rel (0) target = $region13
  $region12: #{mlp_forward.1} parent=0 // pred_region
    _
  $region13: #{mlp_forward.1} parent=0 // pred_fallthru
    _
  // Predicated region
  $region14: #{mlp_forward.1} parent=0 // pred_check
    _
  $region15: #{mlp_forward.1} parent=0 // pred_check_branch
    %273 = sbr.rel (0) target = $region17
  $region16: #{mlp_forward.1} parent=0 // pred_region
    _
  $region17: #{mlp_forward.1} parent=0 // pred_fallthru
    _

</llo_original>
